<compile_context>
chip_gen: v5e
topology: v5e:2x2
jax: 0.10.0
libtpu: 0.0.40
codegen_flags: <defaults>
</compile_context>

<pallas_src>
import functools

import jax
import jax.numpy as jnp
from jax.experimental import pallas as pl
from jax.experimental.pallas import tpu as pltpu

_EPS = 1e-5
_LANE = 128
_MATMUL_DTYPE = jnp.bfloat16  # MXU-native operand dtype (f32 accumulation)

# Row indices inside the packed (NROWS, SLAB_W) parameter slab.
_ROW_B1, _ROW_G1, _ROW_BE1 = 0, 1, 2          # encoder layer 1 bias / gamma / beta
_ROW_B2, _ROW_G2, _ROW_BE2 = 3, 4, 5          # encoder layer 2
_ROW_BFD, _ROW_GFD, _ROW_BEFD = 6, 7, 8       # fused projector/decoder layer 1
_ROW_BTAIL = 9                                # fused projector/decoder final bias
_NROWS = 10


def _round_up(n, m):
    return (n + m - 1) // m * m


def _bn_relu(y, gamma, beta):
    """Training-mode BatchNorm1d (batch stats, biased var) + ReLU, in f32.

    Two-pass variance (reuses y - mu) to avoid the mean(y*y) - mu*mu
    cancellation issue.
    """
    mu = jnp.mean(y, axis=0, keepdims=True)
    d = y - mu
    var = jnp.mean(d * d, axis=0, keepdims=True)
    return jnp.maximum(d * jax.lax.rsqrt(var + _EPS) * gamma + beta, 0.0)


def _ssl_forward_kernel(
    x_ref,      # (B, Dp)            f32  (cast to bf16 in-kernel)
    w1_ref,     # (Dp, Hp)           bf16
    w2_ref,     # (Hp, H2p)          bf16
    wfd_ref,    # (H2p, H4p+Hp)      bf16  fused projector/decoder layer-1 weight
    wtail_ref,  # (H4p+Hp, Pp+Dp)    bf16  block-diagonal fused final weight
    vec_ref,    # (NROWS, SLAB_W)    f32   packed biases / gammas / betas
    h_ref,      # (B, H2p)           f32
    zx_ref,     # (B, Pp+Dp)         f32   fused [z | x_hat] output slab
    *, hp, h2p, h4p, pp, dp,
):
    def row(i, n):
        return vec_ref[i:i + 1, :n]          # static (1, n) slice of the slab

    x = x_ref[...].astype(_MATMUL_DTYPE)     # in-kernel cast (VPU, hidden under MXU)

    # ---- encoder: Linear -> BN -> ReLU -> Linear -> BN -> ReLU ----
    a1 = jnp.dot(x, w1_ref[...], preferred_element_type=jnp.float32) + row(_ROW_B1, hp)
    a1 = _bn_relu(a1, row(_ROW_G1, hp), row(_ROW_BE1, hp))
    h = (jnp.dot(a1.astype(_MATMUL_DTYPE), w2_ref[...],
                 preferred_element_type=jnp.float32) + row(_ROW_B2, h2p))
    h = _bn_relu(h, row(_ROW_G2, h2p), row(_ROW_BE2, h2p))
    h_ref[...] = h

    # ---- fused projector/decoder first layer: one wide matmul + one BN ----
    nf = h4p + hp
    pd = (jnp.dot(h.astype(_MATMUL_DTYPE), wfd_ref[...],
                  preferred_element_type=jnp.float32) + row(_ROW_BFD, nf))
    pd = _bn_relu(pd, row(_ROW_GFD, nf), row(_ROW_BEFD, nf))

    # ---- fused projector/decoder final layer: one block-diagonal matmul ----
    # wtail = [[wp2, 0], [0, wd2]]  ->  zx[:, :pp] = p1@wp2+bp2, zx[:, pp:] = d1@wd2+bd2
    nt = pp + dp
    zx_ref[...] = (jnp.dot(pd.astype(_MATMUL_DTYPE), wtail_ref[...],
                           preferred_element_type=jnp.float32) + row(_ROW_BTAIL, nt))


def make_params(key, input_dim, hidden_dim, proj_dim):
    """Deterministic synthetic parameters (same shapes as the nn.Module).

    Linear weights are stored as (in_features, out_features), the transpose of
    PyTorch's nn.Linear.weight, so forward is y = x @ W + b.
    """
    h2, h4 = hidden_dim // 2, hidden_dim // 4

    def linear(k, fan_in, fan_out):
        kw, kb = jax.random.split(k)
        scale = 1.0 / jnp.sqrt(jnp.float32(fan_in))
        w = jax.random.uniform(kw, (fan_in, fan_out), jnp.float32, -scale, scale)
        b = jax.random.uniform(kb, (1, fan_out), jnp.float32, -scale, scale)
        return w, b

    def bn(k, n):
        # PyTorch default init is gamma=1, beta=0; perturb gamma slightly so
        # the affine term is actually exercised (deterministically).
        g = 1.0 + 0.1 * jax.random.normal(k, (1, n), jnp.float32)
        b = jnp.zeros((1, n), jnp.float32)
        return g, b

    keys = jax.random.split(key, 16)
    w1, b1 = linear(keys[0], input_dim, hidden_dim)
    g1, be1 = bn(keys[1], hidden_dim)
    w2, b2 = linear(keys[2], hidden_dim, h2)
    g2, be2 = bn(keys[3], h2)

    wp1, bp1 = linear(keys[4], h2, h4)
    gp, bep = bn(keys[5], h4)
    wp2, bp2 = linear(keys[6], h4, proj_dim)

    wd1, bd1 = linear(keys[7], h2, hidden_dim)
    gd, bed = bn(keys[8], hidden_dim)
    wd2, bd2 = linear(keys[9], hidden_dim, input_dim)

    return (
        w1, b1, g1, be1, w2, b2, g2, be2,
        wp1, bp1, gp, bep, wp2, bp2,
        wd1, bd1, gd, bed, wd2, bd2,
    )


def _pad2d(a, rows, cols):
    return jnp.pad(a, ((0, rows - a.shape[0]), (0, cols - a.shape[1])))


def _pad_row(a, cols):
    return jnp.pad(a, ((0, 0), (0, cols - a.shape[1])))


def prepare_params(params, *, input_dim, hidden_dim, proj_dim):
    """ONE-TIME prep: lane-pad, cast weights to bf16, fuse layers, pack slab.

    Run this once per parameter update (outside the per-step hot path); the
    jitted ssl_forward then reads only these pre-built buffers.
    """
    (w1, b1, g1, be1, w2, b2, g2, be2,
     wp1, bp1, gp, bep, wp2, bp2,
     wd1, bd1, gd, bed, wd2, bd2) = params

    h2, h4 = hidden_dim // 2, hidden_dim // 4
    dp = _round_up(input_dim, _LANE)
    hp = _round_up(hidden_dim, _LANE)
    h2p = _round_up(h2, _LANE)
    h4p = _round_up(h4, _LANE)
    pp = _round_up(proj_dim, _LANE)
    slab_w = max(hp, h2p, h4p + hp, pp + dp)

    # ---- weights (zero-padded, bf16) ----
    w1_p = _pad2d(w1, dp, hp).astype(_MATMUL_DTYPE)
    w2_p = _pad2d(w2, hp, h2p).astype(_MATMUL_DTYPE)
    # fused projector/decoder layer-1 weight; each half padded to a 128-aligned block
    wfd_p = jnp.concatenate(
        [_pad2d(wp1, h2p, h4p), _pad2d(wd1, h2p, hp)], axis=1
    ).astype(_MATMUL_DTYPE)
    # block-diagonal fused final weight: [[wp2, 0], [0, wd2]]
    wtail = jnp.zeros((h4p + hp, pp + dp), jnp.float32)
    wtail = wtail.at[:h4, :proj_dim].set(wp2)
    wtail = wtail.at[h4p:h4p + hidden_dim, pp:pp + input_dim].set(wd2)
    wtail_p = wtail.astype(_MATMUL_DTYPE)

    # ---- pack all (1, n) vectors into one f32 slab: one DMA instead of many ----
    def fuse_fd(a, b):
        return jnp.concatenate([_pad_row(a, h4p), _pad_row(b, hp)], axis=1)

    btail = jnp.zeros((1, pp + dp), jnp.float32)
    btail = btail.at[:, :proj_dim].set(bp2)
    btail = btail.at[:, pp:pp + input_dim].set(bd2)

    rows = [None] * _NROWS
    rows[_ROW_B1], rows[_ROW_G1], rows[_ROW_BE1] = b1, g1, be1
    rows[_ROW_B2], rows[_ROW_G2], rows[_ROW_BE2] = b2, g2, be2
    rows[_ROW_BFD] = fuse_fd(bp1, bd1)
    rows[_ROW_GFD] = fuse_fd(gp, gd)
    rows[_ROW_BEFD] = fuse_fd(bep, bed)
    rows[_ROW_BTAIL] = btail
    slab = jnp.concatenate([_pad_row(r, slab_w) for r in rows], axis=0)

    return {"w1": w1_p, "w2": w2_p, "wfd": wfd_p, "wtail": wtail_p, "slab": slab}


@functools.partial(jax.jit, static_argnames=("hidden_dim", "proj_dim"))
def ssl_forward(x, prepared, *, hidden_dim, proj_dim):
    w1_p, w2_p = prepared["w1"], prepared["w2"]
    wfd_p, wtail_p, slab = prepared["wfd"], prepared["wtail"], prepared["slab"]

    B, D = x.shape
    h2 = hidden_dim // 2
    # Padded dims are static, derived from the prepared-weight shapes.
    dp, hp = w1_p.shape
    h2p = w2_p.shape[1]
    h4p = wfd_p.shape[1] - hp
    pp = wtail_p.shape[1] - dp

    # x stays f32; only zero-padded to a lane-dense width (cast happens in-kernel).
    x_p = _pad2d(x, B, dp)

    # ---- cost estimate (helps XLA schedule around the custom call) ----
    flops = 2 * B * (dp * hp + hp * h2p + h2p * (h4p + hp) + (h4p + hp) * (pp + dp))
    bytes_accessed = (
        x_p.size * 4
        + (w1_p.size + w2_p.size + wfd_p.size + wtail_p.size) * 2
        + slab.size * 4
        + B * (h2p + pp + dp) * 4
    )
    cost = pl.CostEstimate(
        flops=flops,
        transcendentals=hp + h2p + (h4p + hp),   # rsqrt per BN feature
        bytes_accessed=bytes_accessed,
    )

    # vmem limit derived from actual buffer sizes (4x headroom for
    # intermediates), clamped to sane bounds.  Avoids a hard-coded 32 MiB.
    vmem_limit = int(min(max(4 * bytes_accessed, 16 * 1024 * 1024),
                         100 * 1024 * 1024))

    kernel = functools.partial(
        _ssl_forward_kernel, hp=hp, h2p=h2p, h4p=h4p, pp=pp, dp=dp
    )
    vmem = pl.BlockSpec(memory_space=pltpu.MemorySpace.VMEM)
    out_shapes = (
        jax.ShapeDtypeStruct((B, h2p), jnp.float32),      # h            (lane-padded)
        jax.ShapeDtypeStruct((B, pp + dp), jnp.float32),  # [z | x_hat]  (lane-padded)
    )
    h_p, zx_p = pl.pallas_call(
        kernel,
        out_shape=out_shapes,
        in_specs=[vmem] * 6,
        out_specs=(vmem, vmem),
        compiler_params=pltpu.CompilerParams(vmem_limit_bytes=vmem_limit),
        cost_estimate=cost,
    )(x_p, w1_p, w2_p, wfd_p, wtail_p, slab)

    # un-pad back to the module's logical shapes
    h = h_p[:, :h2]
    z = zx_p[:, :proj_dim]
    x_hat = zx_p[:, pp:pp + D]
    return h, z, x_hat


def _bn_relu_ref(y, gamma, beta):
    mu = jnp.mean(y, axis=0, keepdims=True)
    var = jnp.mean((y - mu) * (y - mu), axis=0, keepdims=True)
    return jnp.maximum((y - mu) * jax.lax.rsqrt(var + _EPS) * gamma + beta, 0.0)


def _reference_forward(x, params):
    """Plain-JAX f32 reference of the same math (for a correctness check)."""
    (w1, b1, g1, be1, w2, b2, g2, be2,
     wp1, bp1, gp, bep, wp2, bp2,
     wd1, bd1, gd, bed, wd2, bd2) = params
    a1 = _bn_relu_ref(x @ w1 + b1, g1, be1)
    h = _bn_relu_ref(a1 @ w2 + b2, g2, be2)
    p1 = _bn_relu_ref(h @ wp1 + bp1, gp, bep)
    z = p1 @ wp2 + bp2
    d1 = _bn_relu_ref(h @ wd1 + bd1, gd, bed)
    x_hat = d1 @ wd2 + bd2
    return h, z, x_hat


if __name__ == "__main__":
    batch = 16          # multiple of 16 -> bf16 [16,128] vregs fully packed
    input_dim = 64
    hidden_dim = 32
    proj_dim = 16

    key = jax.random.PRNGKey(0)
    kx, kp = jax.random.split(key)
    x = jax.random.normal(kx, (batch, input_dim), jnp.float32)
    params = make_params(kp, input_dim, hidden_dim, proj_dim)

    # One-time parameter prep (outside the jitted per-step hot path).
    prepared = prepare_params(
        params, input_dim=input_dim, hidden_dim=hidden_dim, proj_dim=proj_dim
    )
    prepared = jax.tree_util.tree_map(jax.block_until_ready, prepared)

    h, z, x_hat = ssl_forward(x, prepared, hidden_dim=hidden_dim, proj_dim=proj_dim)
    jax.block_until_ready((h, z, x_hat))

    h_ref, z_ref, xhat_ref = _reference_forward(x, params)
    assert h.shape == (batch, hidden_dim // 2)
    assert z.shape == (batch, proj_dim)
    assert x_hat.shape == (batch, input_dim)
    # bf16 MXU operands (f32 accumulation) -> loosened tolerance vs f32 ref.
    assert jnp.allclose(h, h_ref, atol=5e-2, rtol=5e-2)
    assert jnp.allclose(z, z_ref, atol=5e-2, rtol=5e-2)
    assert jnp.allclose(x_hat, xhat_ref, atol=5e-2, rtol=5e-2)

    print("KERNEL_OK")
</pallas_src>

<mosaic_0001>
module attributes {stable_mosaic.version = 11 : i64} {
  func.func @_ssl_forward_kernel(%arg0: memref<16x128xf32, #tpu.memory_space<vmem>>, %arg1: memref<128x128xbf16, #tpu.memory_space<vmem>>, %arg2: memref<128x128xbf16, #tpu.memory_space<vmem>>, %arg3: memref<128x256xbf16, #tpu.memory_space<vmem>>, %arg4: memref<256x256xbf16, #tpu.memory_space<vmem>>, %arg5: memref<10x256xf32, #tpu.memory_space<vmem>>, %arg6: memref<16x128xf32, #tpu.memory_space<vmem>>, %arg7: memref<16x256xf32, #tpu.memory_space<vmem>>) attributes {dimension_semantics = [], scalar_prefetch = 0 : i64, scratch_operands = 0 : i64, tpu.core_type = #tpu.core_type<tc>} {
    %c0 = arith.constant 0 : index
    %c0_0 = arith.constant 0 : index
    %0 = vector.load %arg0[%c0, %c0_0] : memref<16x128xf32, #tpu.memory_space<vmem>>, vector<16x128xf32>
    %1 = arith.truncf %0 : vector<16x128xf32> to vector<16x128xbf16>
    %c0_1 = arith.constant 0 : index
    %c0_2 = arith.constant 0 : index
    %2 = vector.load %arg1[%c0_1, %c0_2] : memref<128x128xbf16, #tpu.memory_space<vmem>>, vector<128x128xbf16>
    %cst = arith.constant dense<0.000000e+00> : vector<16x128xf32>
    %3 = tpu.matmul %1, %2, %cst {dimension_numbers = #tpu.dot_dimension_numbers<[1], [0], [0], [1], [0, 0, 1, 1], [], []>} : vector<16x128xbf16>, vector<128x128xbf16>, vector<16x128xf32> -> vector<16x128xf32>
    %c0_3 = arith.constant 0 : index
    %c0_4 = arith.constant 0 : index
    %4 = vector.load %arg5[%c0_3, %c0_4] : memref<10x256xf32, #tpu.memory_space<vmem>>, vector<1x128xf32>
    %5 = vector.broadcast %4 : vector<1x128xf32> to vector<16x128xf32>
    %6 = arith.addf %3, %5 : vector<16x128xf32>
    %c1 = arith.constant 1 : index
    %c0_5 = arith.constant 0 : index
    %7 = vector.load %arg5[%c1, %c0_5] : memref<10x256xf32, #tpu.memory_space<vmem>>, vector<1x128xf32>
    %c2 = arith.constant 2 : index
    %c0_6 = arith.constant 0 : index
    %8 = vector.load %arg5[%c2, %c0_6] : memref<10x256xf32, #tpu.memory_space<vmem>>, vector<1x128xf32>
    %cst_7 = arith.constant dense<0.000000e+00> : vector<128xf32>
    %9 = vector.multi_reduction <add>, %6, %cst_7 [0] : vector<16x128xf32> to vector<128xf32>
    %10 = vector.shape_cast %9 : vector<128xf32> to vector<1x128xf32>
    %cst_8 = arith.constant 1.600000e+01 : f32
    %11 = vector.broadcast %cst_8 : f32 to vector<1x128xf32>
    %12 = arith.divf %10, %11 : vector<1x128xf32>
    %13 = vector.broadcast %12 : vector<1x128xf32> to vector<16x128xf32>
    %14 = arith.subf %6, %13 : vector<16x128xf32>
    %15 = arith.mulf %14, %14 : vector<16x128xf32>
    %cst_9 = arith.constant dense<0.000000e+00> : vector<128xf32>
    %16 = vector.multi_reduction <add>, %15, %cst_9 [0] : vector<16x128xf32> to vector<128xf32>
    %17 = vector.shape_cast %16 : vector<128xf32> to vector<1x128xf32>
    %cst_10 = arith.constant 1.600000e+01 : f32
    %18 = vector.broadcast %cst_10 : f32 to vector<1x128xf32>
    %19 = arith.divf %17, %18 : vector<1x128xf32>
    %cst_11 = arith.constant 9.99999974E-6 : f32
    %20 = vector.broadcast %cst_11 : f32 to vector<1x128xf32>
    %21 = arith.addf %19, %20 : vector<1x128xf32>
    %22 = math.rsqrt %21 : vector<1x128xf32>
    %23 = vector.broadcast %22 : vector<1x128xf32> to vector<16x128xf32>
    %24 = arith.mulf %14, %23 : vector<16x128xf32>
    %25 = vector.broadcast %7 : vector<1x128xf32> to vector<16x128xf32>
    %26 = arith.mulf %24, %25 : vector<16x128xf32>
    %27 = vector.broadcast %8 : vector<1x128xf32> to vector<16x128xf32>
    %28 = arith.addf %26, %27 : vector<16x128xf32>
    %cst_12 = arith.constant 0.000000e+00 : f32
    %29 = vector.broadcast %cst_12 : f32 to vector<16x128xf32>
    %30 = arith.maximumf %28, %29 : vector<16x128xf32>
    %31 = arith.truncf %30 : vector<16x128xf32> to vector<16x128xbf16>
    %c0_13 = arith.constant 0 : index
    %c0_14 = arith.constant 0 : index
    %32 = vector.load %arg2[%c0_13, %c0_14] : memref<128x128xbf16, #tpu.memory_space<vmem>>, vector<128x128xbf16>
    %cst_15 = arith.constant dense<0.000000e+00> : vector<16x128xf32>
    %33 = tpu.matmul %31, %32, %cst_15 {dimension_numbers = #tpu.dot_dimension_numbers<[1], [0], [0], [1], [0, 0, 1, 1], [], []>} : vector<16x128xbf16>, vector<128x128xbf16>, vector<16x128xf32> -> vector<16x128xf32>
    %c3 = arith.constant 3 : index
    %c0_16 = arith.constant 0 : index
    %34 = vector.load %arg5[%c3, %c0_16] : memref<10x256xf32, #tpu.memory_space<vmem>>, vector<1x128xf32>
    %35 = vector.broadcast %34 : vector<1x128xf32> to vector<16x128xf32>
    %36 = arith.addf %33, %35 : vector<16x128xf32>
    %c4 = arith.constant 4 : index
    %c0_17 = arith.constant 0 : index
    %37 = vector.load %arg5[%c4, %c0_17] : memref<10x256xf32, #tpu.memory_space<vmem>>, vector<1x128xf32>
    %c5 = arith.constant 5 : index
    %c0_18 = arith.constant 0 : index
    %38 = vector.load %arg5[%c5, %c0_18] : memref<10x256xf32, #tpu.memory_space<vmem>>, vector<1x128xf32>
    %cst_19 = arith.constant dense<0.000000e+00> : vector<128xf32>
    %39 = vector.multi_reduction <add>, %36, %cst_19 [0] : vector<16x128xf32> to vector<128xf32>
    %40 = vector.shape_cast %39 : vector<128xf32> to vector<1x128xf32>
    %cst_20 = arith.constant 1.600000e+01 : f32
    %41 = vector.broadcast %cst_20 : f32 to vector<1x128xf32>
    %42 = arith.divf %40, %41 : vector<1x128xf32>
    %43 = vector.broadcast %42 : vector<1x128xf32> to vector<16x128xf32>
    %44 = arith.subf %36, %43 : vector<16x128xf32>
    %45 = arith.mulf %44, %44 : vector<16x128xf32>
    %cst_21 = arith.constant dense<0.000000e+00> : vector<128xf32>
    %46 = vector.multi_reduction <add>, %45, %cst_21 [0] : vector<16x128xf32> to vector<128xf32>
    %47 = vector.shape_cast %46 : vector<128xf32> to vector<1x128xf32>
    %cst_22 = arith.constant 1.600000e+01 : f32
    %48 = vector.broadcast %cst_22 : f32 to vector<1x128xf32>
    %49 = arith.divf %47, %48 : vector<1x128xf32>
    %cst_23 = arith.constant 9.99999974E-6 : f32
    %50 = vector.broadcast %cst_23 : f32 to vector<1x128xf32>
    %51 = arith.addf %49, %50 : vector<1x128xf32>
    %52 = math.rsqrt %51 : vector<1x128xf32>
    %53 = vector.broadcast %52 : vector<1x128xf32> to vector<16x128xf32>
    %54 = arith.mulf %44, %53 : vector<16x128xf32>
    %55 = vector.broadcast %37 : vector<1x128xf32> to vector<16x128xf32>
    %56 = arith.mulf %54, %55 : vector<16x128xf32>
    %57 = vector.broadcast %38 : vector<1x128xf32> to vector<16x128xf32>
    %58 = arith.addf %56, %57 : vector<16x128xf32>
    %cst_24 = arith.constant 0.000000e+00 : f32
    %59 = vector.broadcast %cst_24 : f32 to vector<16x128xf32>
    %60 = arith.maximumf %58, %59 : vector<16x128xf32>
    %c0_25 = arith.constant 0 : index
    %c0_26 = arith.constant 0 : index
    %61 = vector.load %arg6[%c0_25, %c0_26] : memref<16x128xf32, #tpu.memory_space<vmem>>, vector<16x128xf32>
    tpu.vector_store %arg6[%c0_25, %c0_26], %60 {strides = array<i32>} : memref<16x128xf32, #tpu.memory_space<vmem>>, vector<16x128xf32>,
    %62 = arith.truncf %60 : vector<16x128xf32> to vector<16x128xbf16>
    %c0_27 = arith.constant 0 : index
    %c0_28 = arith.constant 0 : index
    %63 = vector.load %arg3[%c0_27, %c0_28] : memref<128x256xbf16, #tpu.memory_space<vmem>>, vector<128x256xbf16>
    %cst_29 = arith.constant dense<0.000000e+00> : vector<16x256xf32>
    %64 = tpu.matmul %62, %63, %cst_29 {dimension_numbers = #tpu.dot_dimension_numbers<[1], [0], [0], [1], [0, 0, 1, 1], [], []>} : vector<16x128xbf16>, vector<128x256xbf16>, vector<16x256xf32> -> vector<16x256xf32>
    %c6 = arith.constant 6 : index
    %c0_30 = arith.constant 0 : index
    %65 = vector.load %arg5[%c6, %c0_30] : memref<10x256xf32, #tpu.memory_space<vmem>>, vector<1x256xf32>
    %66 = vector.broadcast %65 : vector<1x256xf32> to vector<16x256xf32>
    %67 = arith.addf %64, %66 : vector<16x256xf32>
    %c7 = arith.constant 7 : index
    %c0_31 = arith.constant 0 : index
    %68 = vector.load %arg5[%c7, %c0_31] : memref<10x256xf32, #tpu.memory_space<vmem>>, vector<1x256xf32>
    %c8 = arith.constant 8 : index
    %c0_32 = arith.constant 0 : index
    %69 = vector.load %arg5[%c8, %c0_32] : memref<10x256xf32, #tpu.memory_space<vmem>>, vector<1x256xf32>
    %cst_33 = arith.constant dense<0.000000e+00> : vector<256xf32>
    %70 = vector.multi_reduction <add>, %67, %cst_33 [0] : vector<16x256xf32> to vector<256xf32>
    %71 = vector.shape_cast %70 : vector<256xf32> to vector<1x256xf32>
    %cst_34 = arith.constant 1.600000e+01 : f32
    %72 = vector.broadcast %cst_34 : f32 to vector<1x256xf32>
    %73 = arith.divf %71, %72 : vector<1x256xf32>
    %74 = vector.broadcast %73 : vector<1x256xf32> to vector<16x256xf32>
    %75 = arith.subf %67, %74 : vector<16x256xf32>
    %76 = arith.mulf %75, %75 : vector<16x256xf32>
    %cst_35 = arith.constant dense<0.000000e+00> : vector<256xf32>
    %77 = vector.multi_reduction <add>, %76, %cst_35 [0] : vector<16x256xf32> to vector<256xf32>
    %78 = vector.shape_cast %77 : vector<256xf32> to vector<1x256xf32>
    %cst_36 = arith.constant 1.600000e+01 : f32
    %79 = vector.broadcast %cst_36 : f32 to vector<1x256xf32>
    %80 = arith.divf %78, %79 : vector<1x256xf32>
    %cst_37 = arith.constant 9.99999974E-6 : f32
    %81 = vector.broadcast %cst_37 : f32 to vector<1x256xf32>
    %82 = arith.addf %80, %81 : vector<1x256xf32>
    %83 = math.rsqrt %82 : vector<1x256xf32>
    %84 = vector.broadcast %83 : vector<1x256xf32> to vector<16x256xf32>
    %85 = arith.mulf %75, %84 : vector<16x256xf32>
    %86 = vector.broadcast %68 : vector<1x256xf32> to vector<16x256xf32>
    %87 = arith.mulf %85, %86 : vector<16x256xf32>
    %88 = vector.broadcast %69 : vector<1x256xf32> to vector<16x256xf32>
    %89 = arith.addf %87, %88 : vector<16x256xf32>
    %cst_38 = arith.constant 0.000000e+00 : f32
    %90 = vector.broadcast %cst_38 : f32 to vector<16x256xf32>
    %91 = arith.maximumf %89, %90 : vector<16x256xf32>
    %92 = arith.truncf %91 : vector<16x256xf32> to vector<16x256xbf16>
    %c0_39 = arith.constant 0 : index
    %c0_40 = arith.constant 0 : index
    %93 = vector.load %arg4[%c0_39, %c0_40] : memref<256x256xbf16, #tpu.memory_space<vmem>>, vector<256x256xbf16>
    %cst_41 = arith.constant dense<0.000000e+00> : vector<16x256xf32>
    %94 = tpu.matmul %92, %93, %cst_41 {dimension_numbers = #tpu.dot_dimension_numbers<[1], [0], [0], [1], [0, 0, 1, 1], [], []>} : vector<16x256xbf16>, vector<256x256xbf16>, vector<16x256xf32> -> vector<16x256xf32>
    %c9 = arith.constant 9 : index
    %c0_42 = arith.constant 0 : index
    %95 = vector.load %arg5[%c9, %c0_42] : memref<10x256xf32, #tpu.memory_space<vmem>>, vector<1x256xf32>
    %96 = vector.broadcast %95 : vector<1x256xf32> to vector<16x256xf32>
    %97 = arith.addf %94, %96 : vector<16x256xf32>
    %c0_43 = arith.constant 0 : index
    %c0_44 = arith.constant 0 : index
    %98 = vector.load %arg7[%c0_43, %c0_44] : memref<16x256xf32, #tpu.memory_space<vmem>>, vector<16x256xf32>
    tpu.vector_store %arg7[%c0_43, %c0_44], %97 {strides = array<i32>} : memref<16x256xf32, #tpu.memory_space<vmem>>, vector<16x256xf32>,
    return
  }
}

</mosaic_0001>

<llo_original>
// kernel: ssl_forward.1
$region0: #{ssl_forward.1}
  #allocation0 [shape = 'u32[]', space=smem, size = 0x4, offset = 0x4, fixed_abs, tag = 'smem constant byte address 0x4 - core index']
  #allocation1 [shape = 'u32[72,128]{1,0:T(1,128)}', space=vmem, size = 0x9000, scoped, tag = 'internal scratch']
  %s0 = inlined_call_operand.vmem [shape: f32[16,128], index: 0, kind: input, shape index: {}]
  %s1 = inlined_call_operand.hbm [shape: bf16[128,128], index: 1, kind: input, shape index: {}]
  %s2 = inlined_call_operand.hbm [shape: bf16[128,128], index: 2, kind: input, shape index: {}]
  %s3 = inlined_call_operand.hbm [shape: bf16[128,256], index: 3, kind: input, shape index: {}]
  %s4 = inlined_call_operand.hbm [shape: bf16[256,256], index: 4, kind: input, shape index: {}]
  %s5 = inlined_call_operand.vmem [shape: f32[10,256], index: 5, kind: input, shape index: {}]
  %s6 = inlined_call_operand.hbm [shape: f32[16,128], index: 6, kind: output, shape index: {0}]
  %s7 = inlined_call_operand.vmem [shape: f32[16,256], index: 7, kind: output, shape index: {1}]
  %8 = xla_tuple %s6, %s7
  %s9 = sld [smem:[#allocation0]]
  $region58: #{ssl_forward.1} parent=0
    _
  %s11 = ssub.s32 1, %s9
  %s12 = scalar_select 0, %s11, %s9
  $region1: #{ssl_forward.1} parent=0
    #allocation2 [shape = 'u8[32768]{0}', space=vmem, size = 0x8000, scoped, tag = 'input window, operand 1, single buffered']
    #allocation3 [shape = 's32[1]{0}', space=sflag, size = 0x4, scoped, tag = 'scoped memory for ssl_forward.1']
    #allocation4 [shape = 's32[1]{0}', space=sflag, size = 0x4, scoped, tag = 'scoped memory for ssl_forward.1']
    #allocation5 [shape = 'u8[32768]{0}', space=vmem, size = 0x8000, scoped, tag = 'input window, operand 2, single buffered']
    #allocation6 [shape = 's32[1]{0}', space=sflag, size = 0x4, scoped, tag = 'scoped memory for ssl_forward.1']
    #allocation7 [shape = 'u8[65536]{0}', space=vmem, size = 0x10000, scoped, tag = 'input window, operand 3, single buffered']
    #allocation8 [shape = 'u8[131072]{0}', space=vmem, size = 0x20000, scoped, tag = 'input window, operand 4, single buffered']
    #allocation9 [shape = 's32[1]{0}', space=sflag, size = 0x4, scoped, tag = 'scoped memory for ssl_forward.1']
    #allocation10 [shape = 'u8[8192]{0}', space=vmem, size = 0x2000, scoped, tag = 'output window, operand 0, single buffered']
    %13 = vsyncpa [#allocation3], 0
    %14 = vsyncpa [#allocation6], 0
    %15 = vsyncpa [#allocation9], 0
    %16 = vsyncpa [#allocation4], 0
    // Predicated region
    $region2: #{ssl_forward.1} parent=1 // pred_check
      _
    $region3: #{ssl_forward.1} parent=1 // pred_check_branch
      %18 = sbr.rel (0) target = $region5
    $region4: #{ssl_forward.1} parent=1 // pred_region
      _
    $region5: #{ssl_forward.1} parent=1 // pred_fallthru
      _
    // Predicated region
    $region6: #{ssl_forward.1} parent=1 // pred_check
      _
    $region7: #{ssl_forward.1} parent=1 // pred_check_branch
      %20 = sbr.rel (0) target = $region9
    $region8: #{ssl_forward.1} parent=1 // pred_region
      %22 = vsyncadd [#allocation3], 0
      %s23 = sshll.u32 %s1, 4
      %s24 = int_to_ptr.hbm [resolvable:$true] %s23
      %s25 = sshll.u32 [#allocation2], 4
      %s26 = int_to_ptr.vmem [resolvable:$true] %s25
      %31 = dma.hbm_to_vmem [thread:$0]  %s24, 1024, %s26, [#allocation3], 64, 64, 4
    $region9: #{ssl_forward.1} parent=1 // pred_fallthru
      _
    // Predicated region
    $region10: #{ssl_forward.1} parent=1 // pred_check
      _
    $region11: #{ssl_forward.1} parent=1 // pred_check_branch
      %33 = sbr.rel (0) target = $region13
    $region12: #{ssl_forward.1} parent=1 // pred_region
      %35 = vsyncadd [#allocation6], 0
      %s36 = sshll.u32 %s2, 4
      %s37 = int_to_ptr.hbm [resolvable:$true] %s36
      %s38 = sshll.u32 [#allocation5], 4
      %s39 = int_to_ptr.vmem [resolvable:$true] %s38
      %44 = dma.hbm_to_vmem [thread:$0]  %s37, 1024, %s39, [#allocation6], 64, 64, 4
    $region13: #{ssl_forward.1} parent=1 // pred_fallthru
      _
    // Predicated region
    $region14: #{ssl_forward.1} parent=1 // pred_check
      _
    $region15: #{ssl_forward.1} parent=1 // pred_check_branch
      %46 = sbr.rel (0) target = $region17
    $region16: #{ssl_forward.1} parent=1 // pred_region
      %48 = vsyncadd [#allocation6], 0
      %s49 = sshll.u32 %s3, 4
      %s50 = int_to_ptr.hbm [resolvable:$true] %s49
      %s51 = sshll.u32 [#allocation7], 4
      %s52 = int_to_ptr.vmem [resolvable:$true] %s51
      %57 = dma.hbm_to_vmem [thread:$0]  %s50, 2048, %s52, [#allocation6], 128, 128, 8
    $region17: #{ssl_forward.1} parent=1 // pred_fallthru
      _
    // Predicated region
    $region18: #{ssl_forward.1} parent=1 // pred_check
      _
    $region19: #{ssl_forward.1} parent=1 // pred_check_branch
      %59 = sbr.rel (0) target = $region21
    $region20: #{ssl_forward.1} parent=1 // pred_region
      %61 = vsyncadd [#allocation9], 0
      %s62 = sshll.u32 %s4, 4
      %s63 = int_to_ptr.hbm [resolvable:$true] %s62
      %s64 = sshll.u32 [#allocation8], 4
      %s65 = int_to_ptr.vmem [resolvable:$true] %s64
      %70 = dma.hbm_to_vmem [thread:$0]  %s63, 4096, %s65, [#allocation9], 128, 128, 8
    $region21: #{ssl_forward.1} parent=1 // pred_fallthru
      _
    // Predicated region
    $region22: #{ssl_forward.1} parent=1 // pred_check
      _
    $region23: #{ssl_forward.1} parent=1 // pred_check_branch
      %72 = sbr.rel (0) target = $region25
    $region24: #{ssl_forward.1} parent=1 // pred_region
      _
    $region25: #{ssl_forward.1} parent=1 // pred_fallthru
      _
    // Predicated region
    $region26: #{ssl_forward.1} parent=1 // pred_check
      _
    $region27: #{ssl_forward.1} parent=1 // pred_check_branch
      %74 = sbr.rel (0) target = $region29
    $region28: #{ssl_forward.1} parent=1 // pred_region
      %76 = dma.done [#allocation3], 1024
    $region29: #{ssl_forward.1} parent=1 // pred_fallthru
      _
    // Predicated region
    $region30: #{ssl_forward.1} parent=1 // pred_check
      _
    $region31: #{ssl_forward.1} parent=1 // pred_check_branch
      %78 = sbr.rel (0) target = $region33
    $region32: #{ssl_forward.1} parent=1 // pred_region
      %80 = dma.done [#allocation6], 1024
    $region33: #{ssl_forward.1} parent=1 // pred_fallthru
      _
    // Predicated region
    $region34: #{ssl_forward.1} parent=1 // pred_check
      _
    $region35: #{ssl_forward.1} parent=1 // pred_check_branch
      %82 = sbr.rel (0) target = $region37
    $region36: #{ssl_forward.1} parent=1 // pred_region
      %84 = dma.done [#allocation6], 2048
    $region37: #{ssl_forward.1} parent=1 // pred_fallthru
      _
    // Predicated region
    $region38: #{ssl_forward.1} parent=1 // pred_check
      _
    $region39: #{ssl_forward.1} parent=1 // pred_check_branch
      %86 = sbr.rel (0) target = $region41
    $region40: #{ssl_forward.1} parent=1 // pred_region
      %88 = dma.done [#allocation9], 4096
    $region41: #{ssl_forward.1} parent=1 // pred_fallthru
      _
    %v89 = vld [vmem:[%s0] sm:$0xff]
    %v90 = vld [vmem:[%s0 + $0x8] sm:$0xff]
    %v91 = vpack.c.bf16 %v90, %v89
    %v92 = vld [vmem:[#allocation2] sm:$0xf]
    %v93 = vld [vmem:[#allocation2 + $0x4] sm:$0xf]
    %v94 = vld [vmem:[#allocation2 + $0x8] sm:$0xf]
    %v95 = vld [vmem:[#allocation2 + $0xc] sm:$0xf]
    %v96 = vld [vmem:[#allocation2 + $0x10] sm:$0xf]
    %v97 = vld [vmem:[#allocation2 + $0x14] sm:$0xf]
    %v98 = vld [vmem:[#allocation2 + $0x18] sm:$0xf]
    %v99 = vld [vmem:[#allocation2 + $0x1c] sm:$0xf]
    %v100 = vld [vmem:[#allocation2 + $0x20] sm:$0xf]
    %v101 = vld [vmem:[#allocation2 + $0x24] sm:$0xf]
    %v102 = vld [vmem:[#allocation2 + $0x28] sm:$0xf]
    %v103 = vld [vmem:[#allocation2 + $0x2c] sm:$0xf]
    %v104 = vld [vmem:[#allocation2 + $0x30] sm:$0xf]
    %v105 = vld [vmem:[#allocation2 + $0x34] sm:$0xf]
    %v106 = vld [vmem:[#allocation2 + $0x38] sm:$0xf]
    %v107 = vld [vmem:[#allocation2 + $0x3c] sm:$0xf]
    %v108 = vld [vmem:[%s5] ss:$0 sm:$0xff]
    %v125 = vunpack.c.l.b16 %v92
    %v126 = vunpack.c.l.b16 %v93
    %v127 = vunpack.c.l.b16 %v94
    %v128 = vunpack.c.l.b16 %v95
    %v129 = vunpack.c.l.b16 %v96
    %v130 = vunpack.c.l.b16 %v97
    %v131 = vunpack.c.l.b16 %v98
    %v132 = vunpack.c.l.b16 %v99
    %v133 = vunpack.c.l.b16 %v100
    %v134 = vunpack.c.l.b16 %v101
    %v135 = vunpack.c.l.b16 %v102
    %v136 = vunpack.c.l.b16 %v103
    %v137 = vunpack.c.l.b16 %v104
    %v138 = vunpack.c.l.b16 %v105
    %v139 = vunpack.c.l.b16 %v106
    %v140 = vunpack.c.l.b16 %v107
    %v141 = vpack.c.b16 %v126, %v125
    %v142 = vpack.c.b16 %v128, %v127
    %v143 = vpack.c.b16 %v130, %v129
    %v144 = vpack.c.b16 %v132, %v131
    %v145 = vpack.c.b16 %v134, %v133
    %v146 = vpack.c.b16 %v136, %v135
    %v147 = vpack.c.b16 %v138, %v137
    %v148 = vpack.c.b16 %v140, %v139
    %157 = vmatpush.bf16.msra.mxu0 %v148
    %158 = vmatpush.bf16.msra.mxu0 %v147
    %159 = vmatpush.bf16.msra.mxu0 %v146
    %160 = vmatpush.bf16.msra.mxu0 %v145
    %161 = vmatpush.bf16.msra.mxu0 %v144
    %162 = vmatpush.bf16.msra.mxu0 %v143
    %163 = vmatpush.bf16.msra.mxu0 %v142
    %164 = vmatpush.bf16.msra.mxu0 %v141
    %165 = vmatmul.bf16.gmra.mxu0 %v91
    %v166 = vpop.f32.mrf.mxu0
    %v167 = vadd.f32 %v108, %v166
    %v168 = vpop.f32.mrf.mxu0
    %v169 = vadd.f32 %v108, %v168
    %170 = vdwg.mxu0
    %v171 = vld [vmem:[%s5 + $0x1] ss:$0 sm:$0xff]
    %v172 = vld [vmem:[%s5 + $0x2] ss:$0 sm:$0xff]
    %v173 = vadd.f32 %v167, %v169
    %v174 = vrot.slane %v173, 4
    %v175 = vadd.f32 %v173, %v174
    %v176 = vrot.slane %v175, 2
    %v177 = vadd.f32 %v175, %v176
    %v178 = vrot.slane %v177, 1
    %v179 = vadd.f32 %v177, %v178
    %v180 = vrcp.pop 16.0
    %v181 = vmul.f32 16.0, %v180
    %v182 = vsub.f32 1.0, %v181
    %v183 = vmul.f32 %v180, %v182
    %v184 = vadd.f32 %v180, %v183
    %vm185 = vweird.f32 %v180
    %v186 = vsel %vm185, %v180, %v184
    %v187 = vmul.f32 %v179, %v186
    %v188 = vsub.f32 %v167, %v187
    %v189 = vsub.f32 %v169, %v187
    %v190 = vmul.f32 %v188, %v188
    %v191 = vmul.f32 %v189, %v189
    %v192 = vadd.f32 %v190, %v191
    %v193 = vrot.slane %v192, 4
    %v194 = vadd.f32 %v192, %v193
    %v195 = vrot.slane %v194, 2
    %v196 = vadd.f32 %v194, %v195
    %v197 = vrot.slane %v196, 1
    %v198 = vadd.f32 %v196, %v197
    %v199 = vmul.f32 %v198, %v186
    %v200 = vadd.f32 %v199, 1e-05
    %v201 = vrsqrt.pop %v200
    %v202 = vmul.f32 %v201, %v200
    %v203 = vmul.f32 %v202, %v201
    %v204 = vmul.f32 0.5, %v203
    %v205 = vsub.f32 1.5, %v204
    %v206 = vmul.f32 %v201, %v205
    %vm207 = vweird.f32 %v200
    %vm208 = vweird.f32 %v201
    %vm209 = vmor %vm207, %vm208
    %v210 = vsel %vm209, %v201, %v206
    %v211 = vmul.f32 %v188, %v210
    %v212 = vmul.f32 %v189, %v210
    %v213 = vmul.f32 %v211, %v171
    %v214 = vmul.f32 %v212, %v171
    %v215 = vadd.f32 %v213, %v172
    %v216 = vadd.f32 %v214, %v172
    %v217 = vmax.f32 %v215, 0.0
    %v218 = vmax.f32 %v216, 0.0
    %v219 = vpack.c.bf16 %v218, %v217
    %v220 = vld [vmem:[#allocation5] sm:$0xf]
    %v221 = vld [vmem:[#allocation5 + $0x4] sm:$0xf]
    %v222 = vld [vmem:[#allocation5 + $0x8] sm:$0xf]
    %v223 = vld [vmem:[#allocation5 + $0xc] sm:$0xf]
    %v224 = vld [vmem:[#allocation5 + $0x10] sm:$0xf]
    %v225 = vld [vmem:[#allocation5 + $0x14] sm:$0xf]
    %v226 = vld [vmem:[#allocation5 + $0x18] sm:$0xf]
    %v227 = vld [vmem:[#allocation5 + $0x1c] sm:$0xf]
    %v228 = vld [vmem:[#allocation5 + $0x20] sm:$0xf]
    %v229 = vld [vmem:[#allocation5 + $0x24] sm:$0xf]
    %v230 = vld [vmem:[#allocation5 + $0x28] sm:$0xf]
    %v231 = vld [vmem:[#allocation5 + $0x2c] sm:$0xf]
    %v232 = vld [vmem:[#allocation5 + $0x30] sm:$0xf]
    %v233 = vld [vmem:[#allocation5 + $0x34] sm:$0xf]
    %v234 = vld [vmem:[#allocation5 + $0x38] sm:$0xf]
    %v235 = vld [vmem:[#allocation5 + $0x3c] sm:$0xf]
    %v236 = vld [vmem:[%s5 + $0x3] ss:$0 sm:$0xff]
    %v253 = vunpack.c.l.b16 %v220
    %v254 = vunpack.c.l.b16 %v221
    %v255 = vunpack.c.l.b16 %v222
    %v256 = vunpack.c.l.b16 %v223
    %v257 = vunpack.c.l.b16 %v224
    %v258 = vunpack.c.l.b16 %v225
    %v259 = vunpack.c.l.b16 %v226
    %v260 = vunpack.c.l.b16 %v227
    %v261 = vunpack.c.l.b16 %v228
    %v262 = vunpack.c.l.b16 %v229
    %v263 = vunpack.c.l.b16 %v230
    %v264 = vunpack.c.l.b16 %v231
    %v265 = vunpack.c.l.b16 %v232
    %v266 = vunpack.c.l.b16 %v233
    %v267 = vunpack.c.l.b16 %v234
    %v268 = vunpack.c.l.b16 %v235
    %v269 = vpack.c.b16 %v254, %v253
    %v270 = vpack.c.b16 %v256, %v255
    %v271 = vpack.c.b16 %v258, %v257
    %v272 = vpack.c.b16 %v260, %v259
    %v273 = vpack.c.b16 %v262, %v261
    %v274 = vpack.c.b16 %v264, %v263
    %v275 = vpack.c.b16 %v266, %v265
    %v276 = vpack.c.b16 %v268, %v267
    %285 = vmatpush.bf16.msra.mxu0 %v276
    %286 = vmatpush.bf16.msra.mxu0 %v275
    %287 = vmatpush.bf16.msra.mxu0 %v274
    %288 = vmatpush.bf16.msra.mxu0 %v273
    %289 = vmatpush.bf16.msra.mxu0 %v272
    %290 = vmatpush.bf16.msra.mxu0 %v271
    %291 = vmatpush.bf16.msra.mxu0 %v270
    %292 = vmatpush.bf16.msra.mxu0 %v269
    %293 = vmatmul.bf16.gmra.mxu0 %v219
    %v294 = vpop.f32.mrf.mxu0
    %v295 = vadd.f32 %v236, %v294
    %v296 = vpop.f32.mrf.mxu0
    %v297 = vadd.f32 %v236, %v296
    %298 = vdwg.mxu0
    %v299 = vld [vmem:[%s5 + $0x4] ss:$0 sm:$0xff]
    %v300 = vld [vmem:[%s5 + $0x5] ss:$0 sm:$0xff]
    %v301 = vadd.f32 %v295, %v297
    %v302 = vrot.slane %v301, 4
    %v303 = vadd.f32 %v301, %v302
    %v304 = vrot.slane %v303, 2
    %v305 = vadd.f32 %v303, %v304
    %v306 = vrot.slane %v305, 1
    %v307 = vadd.f32 %v305, %v306
    %v308 = vmul.f32 %v307, %v186
    %v309 = vsub.f32 %v295, %v308
    %v310 = vsub.f32 %v297, %v308
    %v311 = vmul.f32 %v309, %v309
    %v312 = vmul.f32 %v310, %v310
    %v313 = vadd.f32 %v311, %v312
    %v314 = vrot.slane %v313, 4
    %v315 = vadd.f32 %v313, %v314
    %v316 = vrot.slane %v315, 2
    %v317 = vadd.f32 %v315, %v316
    %v318 = vrot.slane %v317, 1
    %v319 = vadd.f32 %v317, %v318
    %v320 = vmul.f32 %v319, %v186
    %v321 = vadd.f32 %v320, 1e-05
    %v322 = vrsqrt.pop %v321
    %v323 = vmul.f32 %v322, %v321
    %v324 = vmul.f32 %v323, %v322
    %v325 = vmul.f32 0.5, %v324
    %v326 = vsub.f32 1.5, %v325
    %v327 = vmul.f32 %v322, %v326
    %vm328 = vweird.f32 %v321
    %vm329 = vweird.f32 %v322
    %vm330 = vmor %vm328, %vm329
    %v331 = vsel %vm330, %v322, %v327
    %v332 = vmul.f32 %v309, %v331
    %v333 = vmul.f32 %v310, %v331
    %v334 = vmul.f32 %v332, %v299
    %v335 = vmul.f32 %v333, %v299
    %v336 = vadd.f32 %v334, %v300
    %v337 = vadd.f32 %v335, %v300
    %v338 = vmax.f32 %v336, 0.0
    %v339 = vmax.f32 %v337, 0.0
    %340 = vst [vmem:[#allocation10] sm:$0xff] %v338
    %341 = vst [vmem:[#allocation10 + $0x8] sm:$0xff] %v339
    %v342 = vpack.c.bf16 %v339, %v338
    %v343 = vld [vmem:[#allocation7] sm:$0xff]
    %v344 = vld [vmem:[#allocation7 + $0x8] sm:$0xff]
    %v345 = vld [vmem:[#allocation7 + $0x10] sm:$0xff]
    %v346 = vld [vmem:[#allocation7 + $0x18] sm:$0xff]
    %v347 = vld [vmem:[#allocation7 + $0x20] sm:$0xff]
    %v348 = vld [vmem:[#allocation7 + $0x28] sm:$0xff]
    %v349 = vld [vmem:[#allocation7 + $0x30] sm:$0xff]
    %v350 = vld [vmem:[#allocation7 + $0x38] sm:$0xff]
    %v351 = vld [vmem:[#allocation7 + $0x40] sm:$0xff]
    %v352 = vld [vmem:[#allocation7 + $0x48] sm:$0xff]
    %v353 = vld [vmem:[#allocation7 + $0x50] sm:$0xff]
    %v354 = vld [vmem:[#allocation7 + $0x58] sm:$0xff]
    %v355 = vld [vmem:[#allocation7 + $0x60] sm:$0xff]
    %v356 = vld [vmem:[#allocation7 + $0x68] sm:$0xff]
    %v357 = vld [vmem:[#allocation7 + $0x70] sm:$0xff]
    %v358 = vld [vmem:[#allocation7 + $0x78] sm:$0xff]
    %s359 = scalar_lea.vmem %s5, 6
    %v360 = vld [vmem:[%s359] ss:$8 sm:$0x3]
    %v362 = vperm.slane %v360, 0
    %v363 = vperm.slane %v360, 1
    %v382 = vunpack.c.l.b16 %v343
    %v383 = vunpack.c.h.b16 %v343
    %v384 = vunpack.c.l.b16 %v344
    %v385 = vunpack.c.h.b16 %v344
    %v386 = vunpack.c.l.b16 %v345
    %v387 = vunpack.c.h.b16 %v345
    %v388 = vunpack.c.l.b16 %v346
    %v389 = vunpack.c.h.b16 %v346
    %v390 = vunpack.c.l.b16 %v347
    %v391 = vunpack.c.h.b16 %v347
    %v392 = vunpack.c.l.b16 %v348
    %v393 = vunpack.c.h.b16 %v348
    %v394 = vunpack.c.l.b16 %v349
    %v395 = vunpack.c.h.b16 %v349
    %v396 = vunpack.c.l.b16 %v350
    %v397 = vunpack.c.h.b16 %v350
    %v398 = vunpack.c.l.b16 %v351
    %v399 = vunpack.c.h.b16 %v351
    %v400 = vunpack.c.l.b16 %v352
    %v401 = vunpack.c.h.b16 %v352
    %v402 = vunpack.c.l.b16 %v353
    %v403 = vunpack.c.h.b16 %v353
    %v404 = vunpack.c.l.b16 %v354
    %v405 = vunpack.c.h.b16 %v354
    %v406 = vunpack.c.l.b16 %v355
    %v407 = vunpack.c.h.b16 %v355
    %v408 = vunpack.c.l.b16 %v356
    %v409 = vunpack.c.h.b16 %v356
    %v410 = vunpack.c.l.b16 %v357
    %v411 = vunpack.c.h.b16 %v357
    %v412 = vunpack.c.l.b16 %v358
    %v413 = vunpack.c.h.b16 %v358
    %v414 = vpack.c.b16 %v384, %v382
    %v415 = vpack.c.b16 %v385, %v383
    %v416 = vpack.c.b16 %v388, %v386
    %v417 = vpack.c.b16 %v389, %v387
    %v418 = vpack.c.b16 %v392, %v390
    %v419 = vpack.c.b16 %v393, %v391
    %v420 = vpack.c.b16 %v396, %v394
    %v421 = vpack.c.b16 %v397, %v395
    %v422 = vpack.c.b16 %v400, %v398
    %v423 = vpack.c.b16 %v401, %v399
    %v424 = vpack.c.b16 %v404, %v402
    %v425 = vpack.c.b16 %v405, %v403
    %v426 = vpack.c.b16 %v408, %v406
    %v427 = vpack.c.b16 %v409, %v407
    %v428 = vpack.c.b16 %v412, %v410
    %v429 = vpack.c.b16 %v413, %v411
    %446 = vmatpush.bf16.msra.mxu0 %v428
    %447 = vmatpush.bf16.msra.mxu0 %v426
    %448 = vmatpush.bf16.msra.mxu0 %v424
    %449 = vmatpush.bf16.msra.mxu0 %v422
    %450 = vmatpush.bf16.msra.mxu0 %v420
    %451 = vmatpush.bf16.msra.mxu0 %v418
    %452 = vmatpush.bf16.msra.mxu0 %v416
    %453 = vmatpush.bf16.msra.mxu0 %v414
    %454 = vmatmul.bf16.gmra.mxu0 %v342
    %v455 = vpop.f32.mrf.mxu0
    %v456 = vadd.f32 %v362, %v455
    %v457 = vpop.f32.mrf.mxu0
    %v458 = vadd.f32 %v362, %v457
    %459 = vdwg.mxu0
    %460 = vmatpush.bf16.msra.mxu0 %v429
    %461 = vmatpush.bf16.msra.mxu0 %v427
    %462 = vmatpush.bf16.msra.mxu0 %v425
    %463 = vmatpush.bf16.msra.mxu0 %v423
    %464 = vmatpush.bf16.msra.mxu0 %v421
    %465 = vmatpush.bf16.msra.mxu0 %v419
    %466 = vmatpush.bf16.msra.mxu0 %v417
    %467 = vmatpush.bf16.msra.mxu0 %v415
    %468 = vmatmul.bf16.gmra.mxu0 %v342
    %v469 = vpop.f32.mrf.mxu0
    %v470 = vadd.f32 %v363, %v469
    %v471 = vpop.f32.mrf.mxu0
    %v472 = vadd.f32 %v363, %v471
    %473 = vdwg.mxu0
    %s474 = scalar_lea.vmem %s5, 7
    %v475 = vld [vmem:[%s474] ss:$8 sm:$0x3]
    %s476 = scalar_lea.vmem %s5, 16
    %v477 = vld [vmem:[%s476] ss:$8 sm:$0x3]
    %v478 = vadd.f32 %v456, %v458
    %v479 = vrot.slane %v478, 4
    %v480 = vadd.f32 %v478, %v479
    %v481 = vrot.slane %v480, 2
    %v482 = vadd.f32 %v480, %v481
    %v483 = vrot.slane %v482, 1
    %v484 = vadd.f32 %v482, %v483
    %v485 = vadd.f32 %v470, %v472
    %v486 = vrot.slane %v485, 4
    %v487 = vadd.f32 %v485, %v486
    %v488 = vrot.slane %v487, 2
    %v489 = vadd.f32 %v487, %v488
    %v490 = vrot.slane %v489, 1
    %v491 = vadd.f32 %v489, %v490
    %v492 = vmul.f32 %v484, %v186
    %v493 = vmul.f32 %v491, %v186
    %v494 = vsub.f32 %v456, %v492
    %v495 = vsub.f32 %v470, %v493
    %v496 = vsub.f32 %v458, %v492
    %v497 = vsub.f32 %v472, %v493
    %v498 = vmul.f32 %v494, %v494
    %v499 = vmul.f32 %v495, %v495
    %v500 = vmul.f32 %v496, %v496
    %v501 = vmul.f32 %v497, %v497
    %v502 = vadd.f32 %v498, %v500
    %v503 = vrot.slane %v502, 4
    %v504 = vadd.f32 %v502, %v503
    %v505 = vrot.slane %v504, 2
    %v506 = vadd.f32 %v504, %v505
    %v507 = vrot.slane %v506, 1
    %v508 = vadd.f32 %v506, %v507
    %v509 = vadd.f32 %v499, %v501
    %v510 = vrot.slane %v509, 4
    %v511 = vadd.f32 %v509, %v510
    %v512 = vrot.slane %v511, 2
    %v513 = vadd.f32 %v511, %v512
    %v514 = vrot.slane %v513, 1
    %v515 = vadd.f32 %v513, %v514
    %v516 = vmul.f32 %v508, %v186
    %v517 = vmul.f32 %v515, %v186
    %v518 = vadd.f32 %v516, 1e-05
    %v519 = vadd.f32 %v517, 1e-05
    %v520 = vrsqrt.pop %v518
    %v521 = vmul.f32 %v520, %v518
    %v522 = vmul.f32 %v521, %v520
    %v523 = vmul.f32 0.5, %v522
    %v524 = vsub.f32 1.5, %v523
    %v525 = vmul.f32 %v520, %v524
    %vm526 = vweird.f32 %v518
    %vm527 = vweird.f32 %v520
    %vm528 = vmor %vm526, %vm527
    %v529 = vsel %vm528, %v520, %v525
    %v530 = vrsqrt.pop %v519
    %v531 = vmul.f32 %v530, %v519
    %v532 = vmul.f32 %v531, %v530
    %v533 = vmul.f32 0.5, %v532
    %v534 = vsub.f32 1.5, %v533
    %v535 = vmul.f32 %v530, %v534
    %vm536 = vweird.f32 %v519
    %vm537 = vweird.f32 %v530
    %vm538 = vmor %vm536, %vm537
    %v539 = vsel %vm538, %v530, %v535
    %v540 = vmul.f32 %v494, %v529
    %v541 = vmul.f32 %v495, %v539
    %v542 = vmul.f32 %v496, %v529
    %v543 = vmul.f32 %v497, %v539
    %v545 = vperm.slane %v475, 0
    %v546 = vperm.slane %v475, 1
    %v549 = vmul.f32 %v540, %v545
    %v550 = vmul.f32 %v541, %v546
    %v551 = vmul.f32 %v542, %v545
    %v552 = vmul.f32 %v543, %v546
    %v554 = vperm.slane %v477, 0
    %v555 = vperm.slane %v477, 1
    %v558 = vadd.f32 %v549, %v554
    %v559 = vadd.f32 %v550, %v555
    %v560 = vadd.f32 %v551, %v554
    %v561 = vadd.f32 %v552, %v555
    %v562 = vmax.f32 %v558, 0.0
    %v563 = vmax.f32 %v559, 0.0
    %v564 = vmax.f32 %v560, 0.0
    %v565 = vmax.f32 %v561, 0.0
    %v566 = vpack.c.bf16 %v564, %v562
    %v567 = vpack.c.bf16 %v565, %v563
    %v568 = vld [vmem:[#allocation8] sm:$0xff]
    %v569 = vld [vmem:[#allocation8 + $0x8] sm:$0xff]
    %v570 = vld [vmem:[#allocation8 + $0x10] sm:$0xff]
    %v571 = vld [vmem:[#allocation8 + $0x18] sm:$0xff]
    %v572 = vld [vmem:[#allocation8 + $0x20] sm:$0xff]
    %v573 = vld [vmem:[#allocation8 + $0x28] sm:$0xff]
    %v574 = vld [vmem:[#allocation8 + $0x30] sm:$0xff]
    %v575 = vld [vmem:[#allocation8 + $0x38] sm:$0xff]
    %v576 = vld [vmem:[#allocation8 + $0x40] sm:$0xff]
    %v577 = vld [vmem:[#allocation8 + $0x48] sm:$0xff]
    %v578 = vld [vmem:[#allocation8 + $0x50] sm:$0xff]
    %v579 = vld [vmem:[#allocation8 + $0x58] sm:$0xff]
    %v580 = vld [vmem:[#allocation8 + $0x60] sm:$0xff]
    %v581 = vld [vmem:[#allocation8 + $0x68] sm:$0xff]
    %v582 = vld [vmem:[#allocation8 + $0x70] sm:$0xff]
    %v583 = vld [vmem:[#allocation8 + $0x78] sm:$0xff]
    %v584 = vld [vmem:[#allocation8 + $0x80] sm:$0xff]
    %v585 = vld [vmem:[#allocation8 + $0x88] sm:$0xff]
    %v586 = vld [vmem:[#allocation8 + $0x90] sm:$0xff]
    %v587 = vld [vmem:[#allocation8 + $0x98] sm:$0xff]
    %v588 = vld [vmem:[#allocation8 + $0xa0] sm:$0xff]
    %v589 = vld [vmem:[#allocation8 + $0xa8] sm:$0xff]
    %v590 = vld [vmem:[#allocation8 + $0xb0] sm:$0xff]
    %v591 = vld [vmem:[#allocation8 + $0xb8] sm:$0xff]
    %v592 = vld [vmem:[#allocation8 + $0xc0] sm:$0xff]
    %v593 = vld [vmem:[#allocation8 + $0xc8] sm:$0xff]
    %v594 = vld [vmem:[#allocation8 + $0xd0] sm:$0xff]
    %v595 = vld [vmem:[#allocation8 + $0xd8] sm:$0xff]
    %v596 = vld [vmem:[#allocation8 + $0xe0] sm:$0xff]
    %v597 = vld [vmem:[#allocation8 + $0xe8] sm:$0xff]
    %v598 = vld [vmem:[#allocation8 + $0xf0] sm:$0xff]
    %v599 = vld [vmem:[#allocation8 + $0xf8] sm:$0xff]
    %s600 = scalar_lea.vmem %s5, 17
    %v601 = vld [vmem:[%s600] ss:$8 sm:$0x3]
    %v603 = vperm.slane %v601, 0
    %v604 = vperm.slane %v601, 1
    %v639 = vunpack.c.l.b16 %v568
    %v640 = vunpack.c.h.b16 %v568
    %v641 = vunpack.c.l.b16 %v569
    %v642 = vunpack.c.h.b16 %v569
    %v643 = vunpack.c.l.b16 %v570
    %v644 = vunpack.c.h.b16 %v570
    %v645 = vunpack.c.l.b16 %v571
    %v646 = vunpack.c.h.b16 %v571
    %v647 = vunpack.c.l.b16 %v572
    %v648 = vunpack.c.h.b16 %v572
    %v649 = vunpack.c.l.b16 %v573
    %v650 = vunpack.c.h.b16 %v573
    %v651 = vunpack.c.l.b16 %v574
    %v652 = vunpack.c.h.b16 %v574
    %v653 = vunpack.c.l.b16 %v575
    %v654 = vunpack.c.h.b16 %v575
    %v655 = vunpack.c.l.b16 %v576
    %v656 = vunpack.c.h.b16 %v576
    %v657 = vunpack.c.l.b16 %v577
    %v658 = vunpack.c.h.b16 %v577
    %v659 = vunpack.c.l.b16 %v578
    %v660 = vunpack.c.h.b16 %v578
    %v661 = vunpack.c.l.b16 %v579
    %v662 = vunpack.c.h.b16 %v579
    %v663 = vunpack.c.l.b16 %v580
    %v664 = vunpack.c.h.b16 %v580
    %v665 = vunpack.c.l.b16 %v581
    %v666 = vunpack.c.h.b16 %v581
    %v667 = vunpack.c.l.b16 %v582
    %v668 = vunpack.c.h.b16 %v582
    %v669 = vunpack.c.l.b16 %v583
    %v670 = vunpack.c.h.b16 %v583
    %v671 = vunpack.c.l.b16 %v584
    %v672 = vunpack.c.h.b16 %v584
    %v673 = vunpack.c.l.b16 %v585
    %v674 = vunpack.c.h.b16 %v585
    %v675 = vunpack.c.l.b16 %v586
    %v676 = vunpack.c.h.b16 %v586
    %v677 = vunpack.c.l.b16 %v587
    %v678 = vunpack.c.h.b16 %v587
    %v679 = vunpack.c.l.b16 %v588
    %v680 = vunpack.c.h.b16 %v588
    %v681 = vunpack.c.l.b16 %v589
    %v682 = vunpack.c.h.b16 %v589
    %v683 = vunpack.c.l.b16 %v590
    %v684 = vunpack.c.h.b16 %v590
    %v685 = vunpack.c.l.b16 %v591
    %v686 = vunpack.c.h.b16 %v591
    %v687 = vunpack.c.l.b16 %v592
    %v688 = vunpack.c.h.b16 %v592
    %v689 = vunpack.c.l.b16 %v593
    %v690 = vunpack.c.h.b16 %v593
    %v691 = vunpack.c.l.b16 %v594
    %v692 = vunpack.c.h.b16 %v594
    %v693 = vunpack.c.l.b16 %v595
    %v694 = vunpack.c.h.b16 %v595
    %v695 = vunpack.c.l.b16 %v596
    %v696 = vunpack.c.h.b16 %v596
    %v697 = vunpack.c.l.b16 %v597
    %v698 = vunpack.c.h.b16 %v597
    %v699 = vunpack.c.l.b16 %v598
    %v700 = vunpack.c.h.b16 %v598
    %v701 = vunpack.c.l.b16 %v599
    %v702 = vunpack.c.h.b16 %v599
    %v703 = vpack.c.b16 %v641, %v639
    %v704 = vpack.c.b16 %v642, %v640
    %v705 = vpack.c.b16 %v645, %v643
    %v706 = vpack.c.b16 %v646, %v644
    %v707 = vpack.c.b16 %v649, %v647
    %v708 = vpack.c.b16 %v650, %v648
    %v709 = vpack.c.b16 %v653, %v651
    %v710 = vpack.c.b16 %v654, %v652
    %v711 = vpack.c.b16 %v657, %v655
    %v712 = vpack.c.b16 %v658, %v656
    %v713 = vpack.c.b16 %v661, %v659
    %v714 = vpack.c.b16 %v662, %v660
    %v715 = vpack.c.b16 %v665, %v663
    %v716 = vpack.c.b16 %v666, %v664
    %v717 = vpack.c.b16 %v669, %v667
    %v718 = vpack.c.b16 %v670, %v668
    %v719 = vpack.c.b16 %v673, %v671
    %v720 = vpack.c.b16 %v674, %v672
    %v721 = vpack.c.b16 %v677, %v675
    %v722 = vpack.c.b16 %v678, %v676
    %v723 = vpack.c.b16 %v681, %v679
    %v724 = vpack.c.b16 %v682, %v680
    %v725 = vpack.c.b16 %v685, %v683
    %v726 = vpack.c.b16 %v686, %v684
    %v727 = vpack.c.b16 %v689, %v687
    %v728 = vpack.c.b16 %v690, %v688
    %v729 = vpack.c.b16 %v693, %v691
    %v730 = vpack.c.b16 %v694, %v692
    %v731 = vpack.c.b16 %v697, %v695
    %v732 = vpack.c.b16 %v698, %v696
    %v733 = vpack.c.b16 %v701, %v699
    %v734 = vpack.c.b16 %v702, %v700
    %767 = vmatpush.bf16.msra.mxu0 %v717
    %768 = vmatpush.bf16.msra.mxu0 %v715
    %769 = vmatpush.bf16.msra.mxu0 %v713
    %770 = vmatpush.bf16.msra.mxu0 %v711
    %771 = vmatpush.bf16.msra.mxu0 %v709
    %772 = vmatpush.bf16.msra.mxu0 %v707
    %773 = vmatpush.bf16.msra.mxu0 %v705
    %774 = vmatpush.bf16.msra.mxu0 %v703
    %775 = vmatmul.bf16.gmra.mxu0 %v566
    %v776 = vpop.f32.mrf.mxu0
    %v777 = vadd.f32 %v603, %v776
    %v778 = vpop.f32.mrf.mxu0
    %v779 = vadd.f32 %v603, %v778
    %780 = vdwg.mxu0
    %781 = vmatpush.bf16.msra.mxu0 %v733
    %782 = vmatpush.bf16.msra.mxu0 %v731
    %783 = vmatpush.bf16.msra.mxu0 %v729
    %784 = vmatpush.bf16.msra.mxu0 %v727
    %785 = vmatpush.bf16.msra.mxu0 %v725
    %786 = vmatpush.bf16.msra.mxu0 %v723
    %787 = vmatpush.bf16.msra.mxu0 %v721
    %788 = vmatpush.bf16.msra.mxu0 %v719
    %789 = vmatmul.bf16.gmra.mxu0 %v567
    %v790 = vpop.f32.mrf.mxu0
    %v791 = vadd.f32 %v777, %v790
    %v792 = vpop.f32.mrf.mxu0
    %v793 = vadd.f32 %v779, %v792
    %794 = vdwg.mxu0
    %795 = vmatpush.bf16.msra.mxu0 %v718
    %796 = vmatpush.bf16.msra.mxu0 %v716
    %797 = vmatpush.bf16.msra.mxu0 %v714
    %798 = vmatpush.bf16.msra.mxu0 %v712
    %799 = vmatpush.bf16.msra.mxu0 %v710
    %800 = vmatpush.bf16.msra.mxu0 %v708
    %801 = vmatpush.bf16.msra.mxu0 %v706
    %802 = vmatpush.bf16.msra.mxu0 %v704
    %803 = vmatmul.bf16.gmra.mxu0 %v566
    %v804 = vpop.f32.mrf.mxu0
    %v805 = vadd.f32 %v604, %v804
    %v806 = vpop.f32.mrf.mxu0
    %v807 = vadd.f32 %v604, %v806
    %808 = vdwg.mxu0
    %809 = vmatpush.bf16.msra.mxu0 %v734
    %810 = vmatpush.bf16.msra.mxu0 %v732
    %811 = vmatpush.bf16.msra.mxu0 %v730
    %812 = vmatpush.bf16.msra.mxu0 %v728
    %813 = vmatpush.bf16.msra.mxu0 %v726
    %814 = vmatpush.bf16.msra.mxu0 %v724
    %815 = vmatpush.bf16.msra.mxu0 %v722
    %816 = vmatpush.bf16.msra.mxu0 %v720
    %817 = vmatmul.bf16.gmra.mxu0 %v567
    %v818 = vpop.f32.mrf.mxu0
    %v819 = vadd.f32 %v805, %v818
    %v820 = vpop.f32.mrf.mxu0
    %v821 = vadd.f32 %v807, %v820
    %822 = vdwg.mxu0
    %823 = vst [vmem:[%s7] sm:$0xff] %v791
    %824 = vst [vmem:[%s7 + $0x8] sm:$0xff] %v819
    %825 = vst [vmem:[%s7 + $0x10] sm:$0xff] %v793
    %826 = vst [vmem:[%s7 + $0x18] sm:$0xff] %v821
    // Predicated region
    $region42: #{ssl_forward.1} parent=1 // pred_check
      _
    $region43: #{ssl_forward.1} parent=1 // pred_check_branch
      %828 = sbr.rel (0) target = $region45
    $region44: #{ssl_forward.1} parent=1 // pred_region
      %830 = vsyncadd [#allocation4], 0
      %s831 = sshll.u32 [#allocation10], 4
      %s832 = int_to_ptr.vmem [resolvable:$true] %s831
      %s833 = sshll.u32 %s6, 4
      %s834 = int_to_ptr.hbm [resolvable:$true] %s833
      %839 = dma.vmem_to_hbm [thread:$0]  %s832, 256, %s834, [#allocation4], 128, 128, 8
    $region45: #{ssl_forward.1} parent=1 // pred_fallthru
      _
    // Predicated region
    $region46: #{ssl_forward.1} parent=1 // pred_check
      _
    $region47: #{ssl_forward.1} parent=1 // pred_check_branch
      %841 = sbr.rel (0) target = $region49
    $region48: #{ssl_forward.1} parent=1 // pred_region
      _
    $region49: #{ssl_forward.1} parent=1 // pred_fallthru
      _
    // Predicated region
    $region50: #{ssl_forward.1} parent=1 // pred_check
      _
    $region51: #{ssl_forward.1} parent=1 // pred_check_branch
      %843 = sbr.rel (0) target = $region53
    $region52: #{ssl_forward.1} parent=1 // pred_region
      %845 = dma.done [#allocation4], 256
    $region53: #{ssl_forward.1} parent=1 // pred_fallthru
      _
    // Predicated region
    $region54: #{ssl_forward.1} parent=1 // pred_check
      _
    $region55: #{ssl_forward.1} parent=1 // pred_check_branch
      %847 = sbr.rel (0) target = $region57
    $region56: #{ssl_forward.1} parent=1 // pred_region
      _
    $region57: #{ssl_forward.1} parent=1 // pred_fallthru
      _
    %848 = vsyncpa [#allocation3], 1
    %849 = vsyncpa [#allocation6], 1
    %850 = vsyncpa [#allocation9], 1
    %851 = vsyncpa [#allocation4], 1

</llo_original>
